<compile_context>
chip_gen: v7x
topology: tpu7x:2x2x1
jax: 0.10.0
libtpu: 0.0.40
codegen_flags: <defaults>
</compile_context>

<pallas_src>
import functools

import jax
import jax.numpy as jnp
from jax.experimental import pallas as pl
from jax.experimental.pallas import tpu as pltpu


_LANE = 128


def _cdiv(a, b):
    return -(-a // b)


def _round_up(x, m):
    return _cdiv(x, m) * m


def _chip_config():
    """(per-input block byte target, vmem_limit_bytes) for the local TPU."""
    kind = ""
    try:
        kind = jax.devices()[0].device_kind.lower()
    except Exception:  # pragma: no cover - CPU / interpret fallbacks
        pass
    if "v5e" in kind or "v5 lite" in kind or "v5lite" in kind:
        # ~0.8 TB/s HBM: 3 MiB blocks are already ~93%+ of roofline and
        # 2 inputs x 2 buffers x 3 MiB stays well inside VMEM.
        return 3 * 1024 * 1024, 24 * 1024 * 1024
    if "v6" in kind or "trillium" in kind:
        # ~1.4 TB/s: 5 MiB blocks push past ~95% of roofline, fits easily.
        return 5 * 1024 * 1024, 40 * 1024 * 1024
    if "v7" in kind:
        # ~3.2 TB/s makes the ~0.35 us per-step overhead expensive at small
        # blocks; 7 MiB/input -> ~28 MiB double-buffered, under 64 MiB VMEM.
        return 7 * 1024 * 1024, 48 * 1024 * 1024
    # Unknown chip: conservative, valid on every generation.
    return 4 * 1024 * 1024, 32 * 1024 * 1024


def _choose_tiles(B, C, HW, itemsize, target_bytes):
    """Pick (Bt, CT, TL) block sizes that are layout-legal and VMEM-safe."""
    # Sublane quantum for this dtype: C sits on the sublane axis of the
    # (Bt, C, TL) block, so its *padded* size is what VMEM actually costs.
    c_quant = max(8, 32 // itemsize)
    c_pad = _round_up(C, c_quant)
    hw_pad = _round_up(HW, _LANE)

    def max_tl(bt, ct_pad):
        lanes = target_bytes // max(1, bt * ct_pad * itemsize)
        return (lanes // _LANE) * _LANE

    # Prefer contiguous per-(b, c)-row runs of >= ~2 KiB before shrinking Bt.
    tl_pref = _round_up(max(1, 2048 // itemsize), _LANE)

    bt = min(B, 8)
    ct = C                      # full channel dim: no padding inside the reduction
    tl = max_tl(bt, c_pad)
    if tl < min(tl_pref, hw_pad) and bt > 1:
        # Shrink the batch tile (cheap: only output sublane fill) before
        # shrinking the spatial tile (expensive: shorter HBM runs).
        bt = 1
        tl = max_tl(bt, c_pad)
    if tl < _LANE:
        # Even a (1, C_pad, 128) block exceeds the budget: split the channel
        # axis over a third grid dimension instead.
        bt = 1
        tl = _LANE
        ct = (target_bytes // (_LANE * itemsize)) // c_quant * c_quant
        ct = int(max(c_quant, min(ct, c_pad)))
        if ct >= C:
            ct = C
    tl = int(min(max(tl, _LANE), hw_pad))
    return int(bt), int(ct), tl


def _decoder_kernel(zx_ref, zy_ref, o_ref, acc_ref, *, c_total, c_tile, mask_tail):
    # zx_ref / zy_ref : (Bt, CT, TL) VMEM tiles ; o_ref : (Bt, TL) ;
    # acc_ref : (Bt, TL) f32 scratch accumulator (persists across the C axis).
    k = pl.program_id(2)

    @pl.when(k == 0)
    def _init():
        acc_ref[...] = jnp.zeros_like(acc_ref)

    prod = zx_ref[...] * zy_ref[...]                 # multiply in the input dtype
    if mask_tail:
        # Last channel tile is ragged: zero the padded channels so they do not
        # contaminate the reduction.
        ch = c_tile * k + jax.lax.broadcasted_iota(jnp.int32, prod.shape, 1)
        prod = jnp.where(ch < c_total, prod, jnp.zeros_like(prod))
    acc_ref[...] += jnp.sum(prod, axis=1, dtype=jnp.float32)   # f32 accumulate

    @pl.when(k == pl.num_programs(2) - 1)
    def _finalize():
        o_ref[...] = jax.nn.sigmoid(acc_ref[...]).astype(o_ref.dtype)


def sample_decoder(zx, zy):
    """zx, zy: (B, C, H, W) arrays -> (B, H, W) sigmoid similarity."""
    assert zx.shape == zy.shape and zx.dtype == zy.dtype
    B, C, H, W = zx.shape
    HW = H * W

    # Metadata-only reshapes (contiguous), no HBM copies.
    zx_f = zx.reshape(B, C, HW)
    zy_f = zy.reshape(B, C, HW)

    itemsize = jnp.dtype(zx.dtype).itemsize
    target_bytes, vmem_limit = _chip_config()
    Bt, CT, TL = _choose_tiles(B, C, HW, itemsize, target_bytes)

    nb = _cdiv(B, Bt)
    ns = _cdiv(HW, TL)
    nc = _cdiv(C, CT)

    # Guarantee >= 2 parallel tiles so both TensorCores work on v7x.
    if nb * ns == 1:
        if HW > _LANE:
            TL = _round_up(_cdiv(HW, 2), _LANE)
            ns = _cdiv(HW, TL)
        elif B > 1:
            Bt = _cdiv(B, 2)
            nb = _cdiv(B, Bt)

    mask_tail = (nc > 1) and (C % CT != 0)
    kernel = functools.partial(
        _decoder_kernel, c_total=C, c_tile=CT, mask_tail=mask_tail
    )

    cost = pl.CostEstimate(
        flops=2 * B * C * HW,
        transcendentals=B * HW,
        bytes_accessed=(2 * B * C * HW + B * HW) * itemsize,
    )

    out = pl.pallas_call(
        kernel,
        out_shape=jax.ShapeDtypeStruct((B, HW), zx.dtype),
        grid_spec=pltpu.PrefetchScalarGridSpec(
            num_scalar_prefetch=0,
            grid=(nb, ns, nc),
            in_specs=[
                pl.BlockSpec((Bt, CT, TL), lambda b, s, k: (b, k, s)),
                pl.BlockSpec((Bt, CT, TL), lambda b, s, k: (b, k, s)),
            ],
            out_specs=pl.BlockSpec((Bt, TL), lambda b, s, k: (b, s)),
            scratch_shapes=[pltpu.VMEM((Bt, TL), jnp.float32)],
        ),
        compiler_params=pltpu.CompilerParams(
            dimension_semantics=("parallel", "parallel", "arbitrary"),
            vmem_limit_bytes=vmem_limit,
        ),
        cost_estimate=cost,
    )(zx_f, zy_f)

    return out.reshape(B, H, W)


if __name__ == "__main__":
    key = jax.random.PRNGKey(0)
    kx, ky = jax.random.split(key)

    B, C, H, W = 2, 4, 16, 16
    zx = jax.random.normal(kx, (B, C, H, W), dtype=jnp.float32)
    zy = jax.random.normal(ky, (B, C, H, W), dtype=jnp.float32)

    sim = sample_decoder(zx, zy)
    jax.block_until_ready(sim)

    # reference check (plain JAX)
    ref = jax.nn.sigmoid(jnp.sum(zx * zy, axis=1))
    assert sim.shape == (B, H, W)
    assert jnp.allclose(sim, ref, atol=1e-5, rtol=1e-5)

    print("KERNEL_OK")
</pallas_src>

<mosaic_0001>
module attributes {stable_mosaic.version = 11 : i64} {
  func.func @_decoder_kernel(%arg0: i32, %arg1: i32, %arg2: i32, %arg3: memref<2x4x128xf32, #tpu.memory_space<vmem>>, %arg4: memref<2x4x128xf32, #tpu.memory_space<vmem>>, %arg5: memref<2x128xf32, #tpu.memory_space<vmem>>, %arg6: memref<2x128xf32, #tpu.memory_space<vmem>>) attributes {dimension_semantics = [#tpu.dimension_semantics<parallel>, #tpu.dimension_semantics<parallel>, #tpu.dimension_semantics<arbitrary>], iteration_bounds = array<i64: 1, 2, 1>, scalar_prefetch = 0 : i64, scratch_operands = 1 : i64, tpu.core_type = #tpu.core_type<tc>, window_params = [{transform_indices = @transform_0, window_bounds = array<i64: 2, 4, 128>}, {transform_indices = @transform_1, window_bounds = array<i64: 2, 4, 128>}, {transform_indices = @transform_2, window_bounds = array<i64: 2, 128>}]} {
    %c0_i32 = arith.constant 0 : i32
    %0 = arith.cmpi eq, %arg2, %c0_i32 : i32
    %1 = arith.extui %0 : i1 to i32
    %c0_i32_0 = arith.constant 0 : i32
    %2 = arith.cmpi ne, %1, %c0_i32_0 : i32
    scf.if %2 {
      %cst_12 = arith.constant 0.000000e+00 : f32
      %13 = vector.broadcast %cst_12 : f32 to vector<2x128xf32>
      %c0_13 = arith.constant 0 : index
      %c0_14 = arith.constant 0 : index
      %14 = vector.load %arg6[%c0_13, %c0_14] : memref<2x128xf32, #tpu.memory_space<vmem>>, vector<2x128xf32>
      tpu.vector_store %arg6[%c0_13, %c0_14], %13 {strides = array<i32>} : memref<2x128xf32, #tpu.memory_space<vmem>>, vector<2x128xf32>,
    } else {
    }
    %c0 = arith.constant 0 : index
    %c0_1 = arith.constant 0 : index
    %c0_2 = arith.constant 0 : index
    %3 = vector.load %arg3[%c0, %c0_1, %c0_2] : memref<2x4x128xf32, #tpu.memory_space<vmem>>, vector<2x4x128xf32>
    %c0_3 = arith.constant 0 : index
    %c0_4 = arith.constant 0 : index
    %c0_5 = arith.constant 0 : index
    %4 = vector.load %arg4[%c0_3, %c0_4, %c0_5] : memref<2x4x128xf32, #tpu.memory_space<vmem>>, vector<2x4x128xf32>
    %5 = arith.mulf %3, %4 : vector<2x4x128xf32>
    %c0_6 = arith.constant 0 : index
    %c0_7 = arith.constant 0 : index
    %6 = vector.load %arg6[%c0_6, %c0_7] : memref<2x128xf32, #tpu.memory_space<vmem>>, vector<2x128xf32>
    %cst = arith.constant dense<0.000000e+00> : vector<2x128xf32>
    %7 = vector.multi_reduction <add>, %5, %cst [1] : vector<2x4x128xf32> to vector<2x128xf32>
    %8 = arith.addf %6, %7 : vector<2x128xf32>
    %c0_8 = arith.constant 0 : index
    %c0_9 = arith.constant 0 : index
    %9 = vector.load %arg6[%c0_8, %c0_9] : memref<2x128xf32, #tpu.memory_space<vmem>>, vector<2x128xf32>
    tpu.vector_store %arg6[%c0_8, %c0_9], %8 {strides = array<i32>} : memref<2x128xf32, #tpu.memory_space<vmem>>, vector<2x128xf32>,
    %c0_i32_10 = arith.constant 0 : i32
    %10 = arith.cmpi eq, %arg2, %c0_i32_10 : i32
    %11 = arith.extui %10 : i1 to i32
    %c0_i32_11 = arith.constant 0 : i32
    %12 = arith.cmpi ne, %11, %c0_i32_11 : i32
    scf.if %12 {
      %c0_12 = arith.constant 0 : index
      %c0_13 = arith.constant 0 : index
      %13 = vector.load %arg6[%c0_12, %c0_13] : memref<2x128xf32, #tpu.memory_space<vmem>>, vector<2x128xf32>
      %14 = arith.negf %13 : vector<2x128xf32>
      %15 = math.exp %14 : vector<2x128xf32>
      %cst_14 = arith.constant 1.000000e+00 : f32
      %16 = vector.broadcast %cst_14 : f32 to vector<2x128xf32>
      %17 = arith.addf %16, %15 : vector<2x128xf32>
      %18 = arith.divf %16, %17 : vector<2x128xf32>
      %c0_15 = arith.constant 0 : index
      %c0_16 = arith.constant 0 : index
      %19 = vector.load %arg5[%c0_15, %c0_16] : memref<2x128xf32, #tpu.memory_space<vmem>>, vector<2x128xf32>
      tpu.vector_store %arg5[%c0_15, %c0_16], %18 {strides = array<i32>} : memref<2x128xf32, #tpu.memory_space<vmem>>, vector<2x128xf32>,
    } else {
    }
    return
  }
  func.func @transform_0(%arg0: i32, %arg1: i32, %arg2: i32) -> (i32, i32, i32) {
    %c0_i32 = arith.constant 0 : i32
    return %arg0, %arg2, %arg1 : i32, i32, i32
  }
  func.func @transform_1(%arg0: i32, %arg1: i32, %arg2: i32) -> (i32, i32, i32) {
    %c0_i32 = arith.constant 0 : i32
    return %arg0, %arg2, %arg1 : i32, i32, i32
  }
  func.func @transform_2(%arg0: i32, %arg1: i32, %arg2: i32) -> (i32, i32) {
    %c0_i32 = arith.constant 0 : i32
    return %arg0, %arg1 : i32, i32
  }
}

</mosaic_0001>

<llo_original>
// kernel: tpu_custom_call.1
$region0: #{tpu_custom_call.1}
  #allocation0 [shape = 'u32[]', space=smem, size = 0x4, offset = 0x4, fixed_abs, tag = 'smem constant byte address 0x4 - core index']
  #allocation1 [shape = 'u32[144,128]{1,0:T(1,128)}', space=vmem, size = 0x12000, scoped, tag = 'internal scratch']
  #allocation2 [shape = 'f32[2,128]{1,0:T(2,128)}', space=vmem, size = 0x400, scoped, tag = 'scratch operand']
  %s0 = inlined_call_operand.hbm [shape: f32[2,4,256], index: 0, kind: input, shape index: {}]
  %s1 = inlined_call_operand.hbm [shape: f32[2,4,256], index: 1, kind: input, shape index: {}]
  %s2 = inlined_call_operand.hbm [shape: f32[2,256], index: 2, kind: output, shape index: {}]
  %s3 = sld [smem:[#allocation0]]
  $region57: #{tpu_custom_call.1} parent=0
    _
  %s5 = ssub.s32 1, %s3
  %s6 = scalar_select 0, %s5, %s3
  $region1: #{tpu_custom_call.1} parent=0
    #allocation3 [shape = 'u8[8192]{0}', space=vmem, size = 0x2000, scoped, tag = 'input window, operand 0']
    #allocation4 [shape = 's32[2]{0}', space=sflag, size = 0x8, scoped, tag = 'scoped memory for tpu_custom_call.1']
    #allocation5 [shape = 's32[2]{0}', space=sflag, size = 0x8, scoped, tag = 'scoped memory for tpu_custom_call.1']
    #allocation6 [shape = 'u8[8192]{0}', space=vmem, size = 0x2000, scoped, tag = 'input window, operand 1']
    #allocation7 [shape = 's32[2]{0}', space=sflag, size = 0x8, scoped, tag = 'scoped memory for tpu_custom_call.1']
    #allocation8 [shape = 'u8[2048]{0}', space=vmem, size = 0x800, scoped, tag = 'output window, operand 0']
    %7 = vsyncpa [#allocation4], 0
    %s8 = scalar_lea.sflag [#allocation4], 1
    %9 = vsyncpa %s8, 0
    %10 = vsyncpa [#allocation7], 0
    %s11 = scalar_lea.sflag [#allocation7], 1
    %12 = vsyncpa %s11, 0
    %13 = vsyncpa [#allocation5], 0
    %s14 = scalar_lea.sflag [#allocation5], 1
    %15 = vsyncpa %s14, 0
    loop: start=0, step=1, limit=4
    $region2: #{tpu_custom_call.1} parent=1 // loop_pre_header
      _
    $region3: #{tpu_custom_call.1} parent=1 // loop_header
      %s17 = sphi 0, %s21
      %p18 = scmp.ge.s32.totalorder %s17, 4
      %s24 = sphi 0, %s43
      %s25 = sphi 0, %s39
      %s26 = sphi 0, %s35
      %s27 = sphi 0, %s24
      %s28 = sphi 0, %s25
      %s29 = sphi 0, %s26
      %s30 = sphi 0, %s27
      %s31 = sphi 0, %s28
      %s32 = sphi 0, %s29
      %s50 = sphi 0, %s52
      %s53 = sphi 0, %s50
      %s54 = sphi 0, %s53
      %s70 = sphi 0, %s54
      %s80 = sphi 0, %s82
      %s83 = sphi 0, %s80
      %s84 = sphi 0, %s83
      %s100 = sphi 0, %s84
      %s108 = sphi 0, %s110
      %s111 = sphi 0, %s108
      %s112 = sphi 0, %s111
      %s128 = sphi 0, %s112
    $region4: #{tpu_custom_call.1} parent=1 // loop_header_branch
      %20 = sbr.rel (%p18) target = $region8
    $region5: #{tpu_custom_call.1} parent=1 // loop_body
      %s22 = ssub.s32 %s17, 1
      %s23 = ssub.s32 %s17, 2
      %s33 = sadd.s32 1, %s26
      %p34 = scmp.ge.s32.totalorder %s33, 1
      %s35 = scalar_select %p34, 0, %s33
      %s36 = sadd.s32 1, %s25
      %s37 = scalar_select %p34, %s36, %s25
      %p38 = scmp.ge.s32.totalorder %s37, 2
      %s39 = scalar_select %p38, 0, %s37
      %s40 = sadd.s32 1, %s24
      %s41 = scalar_select %p38, %s40, %s24
      %p42 = scmp.ge.s32.totalorder %s41, 1
      %s43 = scalar_select %p42, 0, %s41
      %s44 = ssub.s32 %s24, %s43
      %s45 = ssub.s32 %s26, %s35
      %s46 = sor.u32 %s44, %s45
      %s47 = ssub.s32 %s25, %s39
      %s48 = sor.u32 %s46, %s47
      %p49 = scmp.eq.s32.totalorder %s48, 0
      %s51 = sadd.s32 %s50, 1
      %s52 = scalar_select %p49, %s50, %s51
      %p55 = pneg %p49
      %p56 = scmp.eq.s32.totalorder %s17, 1
      %p57 = por %p55, %p56
      %p58 = scmp.ne.s32.totalorder %s50, %s53
      %p59 = scmp.eq.s32.totalorder %s17, 0
      %p60 = por %p58, %p59
      %p61 = scmp.ne.s32.totalorder %s50, %s53
      %p62 = scmp.eq.s32.totalorder %s22, 1
      %p63 = por %p61, %p62
      %p64 = scmp.ne.s32.totalorder %s53, %s54
      %p65 = scmp.eq.s32.totalorder %s22, 0
      %p66 = por %p64, %p65
      %p67 = scmp.ne.s32.totalorder %s53, %s54
      %p68 = scmp.eq.s32.totalorder %s23, 1
      %p69 = por %p67, %p68
      %p71 = scmp.ne.s32.totalorder %s54, %s70
      %p72 = scmp.eq.s32.totalorder %s23, 0
      %p73 = por %p71, %p72
      %s74 = ssub.s32 %s24, %s43
      %s75 = ssub.s32 %s26, %s35
      %s76 = sor.u32 %s74, %s75
      %s77 = ssub.s32 %s25, %s39
      %s78 = sor.u32 %s76, %s77
      %p79 = scmp.eq.s32.totalorder %s78, 0
      %s81 = sadd.s32 %s80, 1
      %s82 = scalar_select %p79, %s80, %s81
      %p85 = pneg %p79
      %p86 = scmp.eq.s32.totalorder %s17, 1
      %p87 = por %p85, %p86
      %p88 = scmp.ne.s32.totalorder %s80, %s83
      %p89 = scmp.eq.s32.totalorder %s17, 0
      %p90 = por %p88, %p89
      %p91 = scmp.ne.s32.totalorder %s80, %s83
      %p92 = scmp.eq.s32.totalorder %s22, 1
      %p93 = por %p91, %p92
      %p94 = scmp.ne.s32.totalorder %s83, %s84
      %p95 = scmp.eq.s32.totalorder %s22, 0
      %p96 = por %p94, %p95
      %p97 = scmp.ne.s32.totalorder %s83, %s84
      %p98 = scmp.eq.s32.totalorder %s23, 1
      %p99 = por %p97, %p98
      %p101 = scmp.ne.s32.totalorder %s84, %s100
      %p102 = scmp.eq.s32.totalorder %s23, 0
      %p103 = por %p101, %p102
      %s104 = ssub.s32 %s24, %s43
      %s105 = ssub.s32 %s25, %s39
      %s106 = sor.u32 %s104, %s105
      %p107 = scmp.eq.s32.totalorder %s106, 0
      %s109 = sadd.s32 %s108, 1
      %s110 = scalar_select %p107, %s108, %s109
      %p113 = pneg %p107
      %p114 = scmp.eq.s32.totalorder %s17, 1
      %p115 = por %p113, %p114
      %p116 = scmp.ne.s32.totalorder %s108, %s111
      %p117 = scmp.eq.s32.totalorder %s17, 0
      %p118 = por %p116, %p117
      %p119 = scmp.ne.s32.totalorder %s108, %s111
      %p120 = scmp.eq.s32.totalorder %s22, 1
      %p121 = por %p119, %p120
      %p122 = scmp.ne.s32.totalorder %s111, %s112
      %p123 = scmp.eq.s32.totalorder %s22, 0
      %p124 = por %p122, %p123
      %p125 = scmp.ne.s32.totalorder %s111, %s112
      %p126 = scmp.eq.s32.totalorder %s23, 1
      %p127 = por %p125, %p126
      %p129 = scmp.ne.s32.totalorder %s112, %s128
      %p130 = scmp.eq.s32.totalorder %s23, 0
      %p131 = por %p129, %p130
      %p132 = scmp.le.s32.totalorder 1, %s17
      %p133 = scmp.lt.s32.totalorder %s17, 3
      %p134 = pnand %p132, %p133
      %p135 = pneg %p134
      // Predicated region
      $region9: #{tpu_custom_call.1} parent=5 // pred_check
        _
      $region10: #{tpu_custom_call.1} parent=5 // pred_check_branch
        %137 = sbr.rel (%p134) target = $region12
      $region11: #{tpu_custom_call.1} parent=5 // pred_region
        %s138 = ssub.s32 %s17, 1
      $region12: #{tpu_custom_call.1} parent=5 // pred_fallthru
        _
      %p139 = scmp.lt.s32.totalorder %s17, 2
      // Predicated region
      $region13: #{tpu_custom_call.1} parent=5 // pred_check
        %p140 = pneg %p139
      $region14: #{tpu_custom_call.1} parent=5 // pred_check_branch
        %142 = sbr.rel (%p140) target = $region16
      $region15: #{tpu_custom_call.1} parent=5 // pred_region
        // Predicated region
        $region17: #{tpu_custom_call.1} parent=15 // pred_check
          %p143 = pneg %p60
        $region18: #{tpu_custom_call.1} parent=15 // pred_check_branch
          %145 = sbr.rel (%p143) target = $region20
        $region19: #{tpu_custom_call.1} parent=15 // pred_region
          %s146 = sand.u32 %s50, 1
          %s147 = scalar_lea.sflag [#allocation4], %s146
          %s148 = sand.u32 %s50, 1
          %s149 = smul.addr %s148, 8
          %s150 = scalar_lea.vmem [#allocation3], %s149
          %s151 = smul.u32 2, %s24
          %s153 = ssub.s32 128, 128
          %154 = vsyncadd %s147, %s153
          %s155 = smul.addr %s26, 2
          %s156 = sadd.s32 %s25, %s155
          %s157 = smul.addr %s151, 2
          %s158 = sadd.s32 %s156, %s157
          %s159 = smul.addr %s158, 64
          %s160 = scalar_lea.hbm %s0, %s159
          %s161 = sshll.u32 %s150, 4
          %s162 = int_to_ptr.vmem [resolvable:$true] %s161
          %167 = dma.hbm_to_vmem [thread:$0]  %s160, 128, %s162, %s147, 128, 64, 4
        $region20: #{tpu_custom_call.1} parent=15 // pred_fallthru
          _
        // Predicated region
        $region21: #{tpu_custom_call.1} parent=15 // pred_check
          %p168 = pneg %p90
        $region22: #{tpu_custom_call.1} parent=15 // pred_check_branch
          %170 = sbr.rel (%p168) target = $region24
        $region23: #{tpu_custom_call.1} parent=15 // pred_region
          %s171 = sand.u32 %s80, 1
          %s172 = scalar_lea.sflag [#allocation7], %s171
          %s173 = sand.u32 %s80, 1
          %s174 = smul.addr %s173, 8
          %s175 = scalar_lea.vmem [#allocation6], %s174
          %s176 = smul.u32 2, %s24
          %s178 = ssub.s32 128, 128
          %179 = vsyncadd %s172, %s178
          %s180 = smul.addr %s26, 2
          %s181 = sadd.s32 %s25, %s180
          %s182 = smul.addr %s176, 2
          %s183 = sadd.s32 %s181, %s182
          %s184 = smul.addr %s183, 64
          %s185 = scalar_lea.hbm %s1, %s184
          %s186 = sshll.u32 %s175, 4
          %s187 = int_to_ptr.vmem [resolvable:$true] %s186
          %192 = dma.hbm_to_vmem [thread:$0]  %s185, 128, %s187, %s172, 128, 64, 4
        $region24: #{tpu_custom_call.1} parent=15 // pred_fallthru
          _
      $region16: #{tpu_custom_call.1} parent=5 // pred_fallthru
        _
      %p193 = scmp.le.s32.totalorder 1, %s17
      %p194 = scmp.lt.s32.totalorder %s17, 3
      %p195 = pnand %p193, %p194
      %p196 = pneg %p195
      // Predicated region
      $region25: #{tpu_custom_call.1} parent=5 // pred_check
        _
      $region26: #{tpu_custom_call.1} parent=5 // pred_check_branch
        %198 = sbr.rel (%p195) target = $region28
      $region27: #{tpu_custom_call.1} parent=5 // pred_region
        %s199 = ssub.s32 %s17, 1
        %s200 = sand.u32 %s53, 1
        %s201 = scalar_lea.sflag [#allocation4], %s200
        %s202 = sand.u32 %s53, 1
        %s203 = smul.addr %s202, 8
        %s204 = scalar_lea.vmem [#allocation3], %s203
        // Predicated region
        $region29: #{tpu_custom_call.1} parent=27 // pred_check
          %p205 = pneg %p66
        $region30: #{tpu_custom_call.1} parent=27 // pred_check_branch
          %207 = sbr.rel (%p205) target = $region32
        $region31: #{tpu_custom_call.1} parent=27 // pred_region
          %208 = dma.done %s201, 128
        $region32: #{tpu_custom_call.1} parent=27 // pred_fallthru
          _
        %s209 = sand.u32 %s83, 1
        %s210 = scalar_lea.sflag [#allocation7], %s209
        %s211 = sand.u32 %s83, 1
        %s212 = smul.addr %s211, 8
        %s213 = scalar_lea.vmem [#allocation6], %s212
        // Predicated region
        $region33: #{tpu_custom_call.1} parent=27 // pred_check
          %p214 = pneg %p96
        $region34: #{tpu_custom_call.1} parent=27 // pred_check_branch
          %216 = sbr.rel (%p214) target = $region36
        $region35: #{tpu_custom_call.1} parent=27 // pred_region
          %217 = dma.done %s210, 128
        $region36: #{tpu_custom_call.1} parent=27 // pred_fallthru
          _
        %s218 = sand.u32 %s53, 1
        %s219 = scalar_lea.sflag [#allocation4], %s218
        %s220 = sand.u32 %s53, 1
        %s221 = smul.addr %s220, 8
        %s222 = scalar_lea.vmem [#allocation3], %s221
        %p223 = pneg %p66
        %p224 = pneg %p63
        %s225 = sand.u32 %s83, 1
        %s226 = scalar_lea.sflag [#allocation7], %s225
        %s227 = sand.u32 %s83, 1
        %s228 = smul.addr %s227, 8
        %s229 = scalar_lea.vmem [#allocation6], %s228
        %p230 = pneg %p96
        %p231 = pneg %p93
        %p232 = pneg %p124
        %p233 = pneg %p121
        %s234 = sand.u32 %s111, 1
        %s235 = scalar_lea.sflag [#allocation5], %s234
        %s236 = sand.u32 %s111, 1
        %s237 = smul.addr %s236, 2
        %s238 = scalar_lea.vmem [#allocation8], %s237
        %s239 = smul.u32 2, %s27
        %s240 = smul.u32 2, %s27
        %p241 = scmp.eq.s32.totalorder %s29, 0
        // Predicated region
        $region37: #{tpu_custom_call.1} parent=27 // pred_check
          %p242 = pneg %p241
        $region38: #{tpu_custom_call.1} parent=27 // pred_check_branch
          %244 = sbr.rel (%p242) target = $region40
        $region39: #{tpu_custom_call.1} parent=27 // pred_region
          %245 = vst [vmem:[#allocation2] sm:$0x3] 0.0
        $region40: #{tpu_custom_call.1} parent=27 // pred_fallthru
          _
        %v246 = vld [vmem:[%s204] sm:$0xf]
        %v247 = vld [vmem:[%s204 + $0x4] sm:$0xf]
        %v248 = vld [vmem:[%s213] sm:$0xf]
        %v249 = vld [vmem:[%s213 + $0x4] sm:$0xf]
        %v250 = vmul.f32 %v246, %v248
        %v251 = vmul.f32 %v247, %v249
        %v252 = vld [vmem:[#allocation2] sm:$0x3]
        %vm253 = vcmask 1043456
        %v254 = vsel %vm253, %v250, 0.0
        %v255 = vrot.slane %v254, 4
        %v256 = vadd.f32 %v254, %v255
        %v257 = vrot.slane %v256, 2
        %v258 = vadd.f32 %v256, %v257
        %v259 = vrot.slane %v258, 1
        %v260 = vadd.f32 %v258, %v259
        %v261 = vsel %vm253, %v251, 0.0
        %v262 = vrot.slane %v261, 4
        %v263 = vadd.f32 %v261, %v262
        %v264 = vrot.slane %v263, 2
        %v265 = vadd.f32 %v263, %v264
        %v266 = vrot.slane %v265, 1
        %v267 = vadd.f32 %v265, %v266
        %vm270 = vcmask 1041409
        %v271 = vsel %vm270, %v267, %v260
        %v273 = vadd.f32 %v252, %v271
        %274 = vst [vmem:[#allocation2] sm:$0x3] %v273
        // Predicated region
        $region41: #{tpu_custom_call.1} parent=27 // pred_check
          %p275 = pneg %p241
        $region42: #{tpu_custom_call.1} parent=27 // pred_check_branch
          %277 = sbr.rel (%p275) target = $region44
        $region43: #{tpu_custom_call.1} parent=27 // pred_region
          %v278 = vld [vmem:[#allocation2] sm:$0x3]
          %v279 = vxor.u32 %v278, 2147483648
          %v280 = vmul.f32 %v279, 1.442695
          %v281 = vpow.pop %v280
          %v282 = vadd.f32 %v281, 1.0
          %v283 = vrcp.pop %v282
          %v284 = vmul.f32 1.0, %v283
          %285 = vst [vmem:[%s238] sm:$0x3] %v284
        $region44: #{tpu_custom_call.1} parent=27 // pred_fallthru
          _
        %s286 = sand.u32 %s111, 1
        %s287 = scalar_lea.sflag [#allocation5], %s286
        %s288 = sand.u32 %s111, 1
        %s289 = smul.addr %s288, 2
        %s290 = scalar_lea.vmem [#allocation8], %s289
        // Predicated region
        $region45: #{tpu_custom_call.1} parent=27 // pred_check
          %p291 = pneg %p121
        $region46: #{tpu_custom_call.1} parent=27 // pred_check_branch
          %293 = sbr.rel (%p291) target = $region48
        $region47: #{tpu_custom_call.1} parent=27 // pred_region
          %s295 = ssub.s32 32, 32
          %296 = vsyncadd %s287, %s295
          %s297 = smul.addr %s27, 2
          %s298 = sadd.s32 %s28, %s297
          %s299 = smul.addr %s298, 32
          %s300 = scalar_lea.hbm %s2, %s299
          %s302 = sshll.u32 %s290, 4
          %s303 = int_to_ptr.vmem [resolvable:$true] %s302
          %305 = dma.vmem_to_hbm [thread:$0]  %s303, 32, %s300, %s287
        $region48: #{tpu_custom_call.1} parent=27 // pred_fallthru
          _
      $region28: #{tpu_custom_call.1} parent=5 // pred_fallthru
        _
      %p306 = scmp.le.s32.totalorder 2, %s17
      // Predicated region
      $region49: #{tpu_custom_call.1} parent=5 // pred_check
        %p307 = pneg %p306
      $region50: #{tpu_custom_call.1} parent=5 // pred_check_branch
        %309 = sbr.rel (%p307) target = $region52
      $region51: #{tpu_custom_call.1} parent=5 // pred_region
        %s310 = ssub.s32 %s17, 2
        // Predicated region
        $region53: #{tpu_custom_call.1} parent=51 // pred_check
          %p311 = pneg %p127
        $region54: #{tpu_custom_call.1} parent=51 // pred_check_branch
          %313 = sbr.rel (%p311) target = $region56
        $region55: #{tpu_custom_call.1} parent=51 // pred_region
          %s314 = sand.u32 %s112, 1
          %s315 = scalar_lea.sflag [#allocation5], %s314
          %s316 = sand.u32 %s112, 1
          %s317 = smul.addr %s316, 2
          %s318 = scalar_lea.vmem [#allocation8], %s317
          %319 = dma.done %s315, 32
        $region56: #{tpu_custom_call.1} parent=51 // pred_fallthru
          _
      $region52: #{tpu_custom_call.1} parent=5 // pred_fallthru
        _
    $region6: #{tpu_custom_call.1} parent=1 // loop_footer
      %s21 = sadd.s32 1, %s17
    $region7: #{tpu_custom_call.1} parent=1 // loop_footer_branch
      %16 = sbr.rel target = $region3
    $region8: #{tpu_custom_call.1} parent=1 // loop_exit
      _
    %320 = vsyncpa [#allocation4], 1
    %s321 = scalar_lea.sflag [#allocation4], 1
    %322 = vsyncpa %s321, 1
    %323 = vsyncpa [#allocation7], 1
    %s324 = scalar_lea.sflag [#allocation7], 1
    %325 = vsyncpa %s324, 1
    %326 = vsyncpa [#allocation5], 1
    %s327 = scalar_lea.sflag [#allocation5], 1
    %328 = vsyncpa %s327, 1

</llo_original>
